<compile_context>
chip_gen: v7x
topology: tpu7x:2x2x1
jax: 0.10.0
libtpu: 0.0.40
codegen_flags: <defaults>
</compile_context>

<pallas_src>
import functools

import jax
import jax.numpy as jnp
import numpy as np
from jax.experimental import pallas as pl
from jax.experimental.pallas import tpu as pltpu


def _softplus(v):
    # numerically-stable softplus; matches torch.nn.functional.softplus to fp32 tol
    return jnp.maximum(v, 0.0) + jnp.log(1.0 + jnp.exp(-jnp.abs(v)))


def _round_up(a, b):
    return ((a + b - 1) // b) * b


# ---------------------------------------------------------------------------
# kernel
# ---------------------------------------------------------------------------
def _utility_kernel(params_ref, x_ref, o_ref, *, R, function_choice):
    """params_ref (SMEM float32, shape (2R+2,)):
         [0:R]    a_r    per-reward scale   (1/(max-min+1e-5) if norm else 1)
         [R:2R]   b_r    per-reward offset  (-min_r*a_r       if norm else 0)
         [2R]     min_util
         [2R+1]   1/(max_util - min_util + 1e-6)
       x_ref: (R, TILE_N) VMEM tile, samples on lanes.
       o_ref: (1, TILE_N) lane-dense output tile.
    """
    rows = []
    for r in range(R):                                   # unrolled (R is tiny/static)
        xr = x_ref[r:r + 1, :]                           # (1, TILE_N)
        rows.append(xr * params_ref[r] + params_ref[R + r])   # folded normalization

    fc = function_choice
    if fc == 0:                                          # mean over rewards
        u = rows[0]
        for r in range(1, R):
            u = u + rows[r]
        u = u * (1.0 / R)
    elif fc == 1:                                        # max over rewards (default)
        u = rows[0]
        for r in range(1, R):
            u = jnp.maximum(u, rows[r])
    elif fc == 2:                                        # sum over rewards
        u = rows[0]
        for r in range(1, R):
            u = u + rows[r]
    elif fc == 3:
        u = 0.2 * rows[0] + 0.8 * rows[1]
    elif fc == 4:
        u = _softplus(rows[0])
        for r in range(1, R):
            sp = _softplus(rows[r])
            u = u + sp * sp
    elif fc == 5:
        u = -1.0 / (rows[0] + 1e-7)
        for r in range(1, R):
            u = u - 1.0 / (rows[r] + 1e-7)
    elif fc == 6:
        u = _softplus(rows[0])
        for r in range(1, R):
            u = u + _softplus(rows[r])
    elif fc == 7:
        u = None
        for r in range(R):
            sp = _softplus(rows[r])
            term = sp * sp + sp * sp * sp
            u = term if u is None else u + term
    elif fc == 8:
        u = jnp.exp(rows[0])
        for r in range(1, R):
            u = u + jnp.exp(rows[r])
    elif fc == 9:
        u = rows[0]
        for r in range(1, R):
            u = u + rows[r] * rows[r]
    else:
        raise NotImplementedError(f"function_choice={fc}")

    # (util - min_util) / (max_util - min_util + 1e-6), with the reciprocal
    # precomputed once per call.
    o_ref[...] = (u - params_ref[2 * R]) * params_ref[2 * R + 1]


# ---------------------------------------------------------------------------
# plain-JAX helper: utility of the two (1,R) min/max anchor rows (a handful of
# scalars; XLA fuses it with the other scalar prep around the pallas_call)
# ---------------------------------------------------------------------------
def _utility_rows(x, function_choice):
    fc = function_choice
    if fc == 0:
        return jnp.mean(x, axis=1)
    if fc == 1:
        return jnp.max(x, axis=1)
    if fc == 2:
        return jnp.sum(x, axis=1)
    if fc == 3:
        return 0.2 * x[:, 0] + 0.8 * x[:, 1]
    if fc == 4:
        return _softplus(x[:, 0]) + jnp.sum(_softplus(x[:, 1:]) ** 2, axis=1)
    if fc == 5:
        return -jnp.sum(1.0 / (x + 1e-7), axis=1)
    if fc == 6:
        return _softplus(x[:, 0]) + jnp.sum(_softplus(x[:, 1:]), axis=1)
    if fc == 7:
        sp = _softplus(x)
        return jnp.sum(sp ** 2, axis=1) + jnp.sum(sp ** 3, axis=1)
    if fc == 8:
        return jnp.sum(jnp.exp(x), axis=1)
    if fc == 9:
        return x[:, 0] + jnp.sum(x[:, 1:] ** 2, axis=1)
    raise NotImplementedError(f"function_choice={function_choice}")


# ---------------------------------------------------------------------------
# wrapper
# ---------------------------------------------------------------------------
@functools.partial(jax.jit, static_argnames=("norm", "function_choice", "tile_n"))
def utility_function_forward(x, min_val_state, max_val_state, *,
                             norm=True, function_choice=1, tile_n=2048):
    """Functional forward of Utility_Function.

    Returns (util (N,), new_min_val (1,R), new_max_val (1,R)).
    Note: with a fresh +/-inf state, norm=True and N>1 the result is NaN —
    this mirrors the torch module's behavior exactly.
    """
    assert tile_n % 128 == 0
    x = jnp.asarray(x, jnp.float32)
    N, R = x.shape
    min_val = jnp.asarray(min_val_state, jnp.float32).reshape(1, R)
    max_val = jnp.asarray(max_val_state, jnp.float32).reshape(1, R)

    # running min/max buffer update (torch only updates when x.shape[0] == 1)
    if norm and N == 1:
        min_val = jnp.minimum(x, min_val)
        max_val = jnp.maximum(x, max_val)

    # fold normalization into per-component scale/offset (no per-element divides)
    if norm:
        a = 1.0 / (max_val - min_val + 1e-5)          # (1, R)
        b = -min_val * a
    else:
        a = jnp.ones((1, R), jnp.float32)
        b = jnp.zeros((1, R), jnp.float32)

    # utilities of the min/max anchor rows (rows 0 and 1 of torch's concat)
    anchors = jnp.concatenate([min_val, max_val], axis=0) * a + b     # (2, R)
    anchor_u = _utility_rows(anchors, function_choice)                # (2,)
    min_util = anchor_u[0]
    inv_u = 1.0 / (anchor_u[1] - anchor_u[0] + 1e-6)

    params = jnp.concatenate(
        [a.reshape(-1), b.reshape(-1), jnp.stack([min_util, inv_u])]
    ).astype(jnp.float32)                                             # (2R+2,)

    # lane-dense layout: samples on the lane axis, reward components on sublanes
    tile = min(tile_n, _round_up(max(N, 1), 128))
    padded_n = _round_up(N, tile)
    x_t = jnp.pad(x.T, ((0, 0), (0, padded_n - N)))                   # (R, padded_n)

    util = pl.pallas_call(
        functools.partial(_utility_kernel, R=R, function_choice=function_choice),
        grid=(padded_n // tile,),
        in_specs=[
            pl.BlockSpec(memory_space=pltpu.MemorySpace.SMEM),        # scalar params
            pl.BlockSpec((R, tile), lambda i: (0, i)),                # x tile
        ],
        out_specs=pl.BlockSpec((1, tile), lambda i: (0, i)),          # lane-dense out
        out_shape=jax.ShapeDtypeStruct((1, padded_n), jnp.float32),
        compiler_params=pltpu.CompilerParams(
            dimension_semantics=("parallel",),     # shard N-tiles across TCs on v7x
            vmem_limit_bytes=32 * 1024 * 1024,     # explicit, safe on v5e/v6e/v7x
        ),
    )(params, x_t)

    return util[0, :N], min_val, max_val


# ---------------------------------------------------------------------------
# NumPy reference mirroring the torch module exactly
# ---------------------------------------------------------------------------
def _np_softplus(v):
    v = np.asarray(v, np.float32)
    return np.where(v > 20.0, v, np.log1p(np.exp(np.minimum(v, 20.0)))).astype(np.float32)


def _np_compute_utility(x, min_val, max_val, norm, fc):
    if norm:
        x = (x - min_val) / (max_val - min_val + 1e-5)
    if fc == 0:
        return x.mean(1)
    if fc == 1:
        return x.max(1)
    if fc == 2:
        return x.sum(1)
    if fc == 3:
        return 0.2 * x[:, 0] + 0.8 * x[:, 1]
    if fc == 4:
        return _np_softplus(x[:, 0]) + (_np_softplus(x[:, 1:]) ** 2).sum(1)
    if fc == 5:
        return -np.power(x + 1e-7, -1.0).sum(1)
    if fc == 6:
        return _np_softplus(x[:, 0]) + _np_softplus(x[:, 1:]).sum(1)
    if fc == 7:
        return (_np_softplus(x) ** 2).sum(1) + (_np_softplus(x) ** 3).sum(1)
    if fc == 8:
        return np.exp(x).sum(1)
    if fc == 9:
        return x[:, 0] + (x[:, 1:] ** 2).sum(1)
    raise NotImplementedError


def _np_forward(xx, min_val, max_val, norm=True, fc=1):
    x = np.asarray(xx, np.float32)
    min_val = np.asarray(min_val, np.float32).reshape(1, -1).copy()
    max_val = np.asarray(max_val, np.float32).reshape(1, -1).copy()
    if norm and x.shape[0] == 1:
        min_val = np.minimum(x, min_val)
        max_val = np.maximum(x, max_val)
    inputs = np.concatenate([min_val, max_val, x], 0)
    u = _np_compute_utility(inputs, min_val, max_val, norm, fc)
    min_u, max_u, util = u[0], u[1], u[2:]
    return (util - min_u) / (max_u - min_u + 1e-6), min_val, max_val


if __name__ == "__main__":
    key = jax.random.PRNGKey(0)
    k1, k2 = jax.random.split(key)

    R = 2           # reward_shape (module default)
    N = 8           # small batch of reward vectors
    x = jax.random.normal(k1, (N, R), dtype=jnp.float32) * 3.0

    # finite running min/max state (as if populated by earlier batch-of-1 calls)
    min_state = jnp.array([[-4.0, -5.0]], dtype=jnp.float32)
    max_state = jnp.array([[6.0, 5.0]], dtype=jnp.float32)

    # batch path (no state update): default max-utility, sum, and exp choices
    for fc in (1, 2, 8):
        util, new_min, new_max = utility_function_forward(
            x, min_state, max_state, norm=True, function_choice=fc)
        util = np.asarray(jax.block_until_ready(util))
        ref, _, _ = _np_forward(np.asarray(x), np.asarray(min_state),
                                np.asarray(max_state), norm=True, fc=fc)
        np.testing.assert_allclose(util, ref, rtol=1e-5, atol=1e-5)

    # batch-of-1 path: the module updates its running min/max buffers
    x1 = jax.random.normal(k2, (1, R), dtype=jnp.float32) * 3.0
    util1, new_min1, new_max1 = utility_function_forward(
        x1, min_state, max_state, norm=True, function_choice=1)
    util1 = np.asarray(jax.block_until_ready(util1))
    jax.block_until_ready(new_min1)
    jax.block_until_ready(new_max1)
    ref1, ref_min1, ref_max1 = _np_forward(np.asarray(x1), np.asarray(min_state),
                                           np.asarray(max_state), norm=True, fc=1)
    np.testing.assert_allclose(util1, ref1, rtol=1e-5, atol=1e-5)
    np.testing.assert_allclose(np.asarray(new_min1), ref_min1, rtol=1e-6, atol=1e-6)
    np.testing.assert_allclose(np.asarray(new_max1), ref_max1, rtol=1e-6, atol=1e-6)

    print("KERNEL_OK")
</pallas_src>

<mosaic_0001>
module attributes {stable_mosaic.version = 11 : i64} {
  func.func @_utility_kernel(%arg0: i32, %arg1: memref<6xf32, #tpu.memory_space<smem>>, %arg2: memref<2x128xf32, #tpu.memory_space<vmem>>, %arg3: memref<1x128xf32, #tpu.memory_space<vmem>>) attributes {dimension_semantics = [#tpu.dimension_semantics<parallel>], iteration_bounds = array<i64: 1>, scalar_prefetch = 0 : i64, scratch_operands = 0 : i64, tpu.core_type = #tpu.core_type<tc>, window_params = [{transform_indices = @transform_0, window_bounds = array<i64: 6>}, {transform_indices = @transform_1, window_bounds = array<i64: 2, 128>}, {transform_indices = @transform_2, window_bounds = array<i64: 1, 128>}]} {
    %c0 = arith.constant 0 : index
    %c0_0 = arith.constant 0 : index
    %0 = vector.load %arg2[%c0, %c0_0] : memref<2x128xf32, #tpu.memory_space<vmem>>, vector<1x128xf32>
    %c0_1 = arith.constant 0 : index
    %1 = memref.load %arg1[%c0_1] : memref<6xf32, #tpu.memory_space<smem>>
    %2 = vector.broadcast %1 : f32 to vector<1x128xf32>
    %3 = arith.mulf %0, %2 : vector<1x128xf32>
    %c2 = arith.constant 2 : index
    %4 = memref.load %arg1[%c2] : memref<6xf32, #tpu.memory_space<smem>>
    %5 = vector.broadcast %4 : f32 to vector<1x128xf32>
    %6 = arith.addf %3, %5 : vector<1x128xf32>
    %c1 = arith.constant 1 : index
    %c0_2 = arith.constant 0 : index
    %7 = vector.load %arg2[%c1, %c0_2] : memref<2x128xf32, #tpu.memory_space<vmem>>, vector<1x128xf32>
    %c1_3 = arith.constant 1 : index
    %8 = memref.load %arg1[%c1_3] : memref<6xf32, #tpu.memory_space<smem>>
    %9 = vector.broadcast %8 : f32 to vector<1x128xf32>
    %10 = arith.mulf %7, %9 : vector<1x128xf32>
    %c3 = arith.constant 3 : index
    %11 = memref.load %arg1[%c3] : memref<6xf32, #tpu.memory_space<smem>>
    %12 = vector.broadcast %11 : f32 to vector<1x128xf32>
    %13 = arith.addf %10, %12 : vector<1x128xf32>
    %14 = arith.maximumf %6, %13 : vector<1x128xf32>
    %c4 = arith.constant 4 : index
    %15 = memref.load %arg1[%c4] : memref<6xf32, #tpu.memory_space<smem>>
    %16 = vector.broadcast %15 : f32 to vector<1x128xf32>
    %17 = arith.subf %14, %16 : vector<1x128xf32>
    %c5 = arith.constant 5 : index
    %18 = memref.load %arg1[%c5] : memref<6xf32, #tpu.memory_space<smem>>
    %19 = vector.broadcast %18 : f32 to vector<1x128xf32>
    %20 = arith.mulf %17, %19 : vector<1x128xf32>
    %c0_4 = arith.constant 0 : index
    %c0_5 = arith.constant 0 : index
    %21 = vector.load %arg3[%c0_4, %c0_5] : memref<1x128xf32, #tpu.memory_space<vmem>>, vector<1x128xf32>
    tpu.vector_store %arg3[%c0_4, %c0_5], %20 {strides = array<i32>} : memref<1x128xf32, #tpu.memory_space<vmem>>, vector<1x128xf32>,
    return
  }
  func.func @transform_0(%arg0: i32) -> i32 {
    %c0_i32 = arith.constant 0 : i32
    %c0_i32_0 = arith.constant 0 : i32
    return %c0_i32 : i32
  }
  func.func @transform_1(%arg0: i32) -> (i32, i32) {
    %c0_i32 = arith.constant 0 : i32
    %c0_i32_0 = arith.constant 0 : i32
    return %c0_i32, %arg0 : i32, i32
  }
  func.func @transform_2(%arg0: i32) -> (i32, i32) {
    %c0_i32 = arith.constant 0 : i32
    %c0_i32_0 = arith.constant 0 : i32
    return %c0_i32, %arg0 : i32, i32
  }
}

</mosaic_0001>

<llo_original>
// kernel: utility_function_forward.1
$region0: #{utility_function_forward.1}
  #allocation0 [shape = 'u32[]', space=smem, size = 0x4, offset = 0x4, fixed_abs, tag = 'smem constant byte address 0x4 - core index']
  #allocation1 [shape = 'u32[144,128]{1,0:T(1,128)}', space=vmem, size = 0x12000, scoped, tag = 'internal scratch']
  %s0 = inlined_call_operand.vmem [shape: f32[6], index: 0, kind: input, shape index: {}]
  %s1 = inlined_call_operand.vmem [shape: f32[2,128], index: 1, kind: input, shape index: {}]
  %s2 = inlined_call_operand.vmem [shape: f32[1,128], index: 2, kind: output, shape index: {}]
  %s3 = sld [smem:[#allocation0]]
  $region22: #{utility_function_forward.1} parent=0
    _
  %s5 = ssub.s32 1, %s3
  %s6 = scalar_select 0, %s5, %s3
  $region1: #{utility_function_forward.1} parent=0
    #allocation2 [shape = 'u8[512]{0}', space=smem, size = 0x200, scoped, tag = 'input window, operand 0, single buffered']
    #allocation3 [shape = 's32[1]{0}', space=sflag, size = 0x4, scoped, tag = 'scoped memory for utility_function_forward.1']
    %7 = vsyncpa [#allocation3], 0
    // Predicated region
    $region2: #{utility_function_forward.1} parent=1 // pred_check
      _
    $region3: #{utility_function_forward.1} parent=1 // pred_check_branch
      %9 = sbr.rel (0) target = $region5
    $region4: #{utility_function_forward.1} parent=1 // pred_region
      %s11 = ssub.s32 16, 16
      %12 = vsyncadd [#allocation3], %s11
      %s14 = sshll.u32 %s0, 4
      %s15 = int_to_ptr.vmem [resolvable:$true] %s14
      %17 = dma.vmem_to_smem %s15, 16, [#allocation2], [#allocation3]
    $region5: #{utility_function_forward.1} parent=1 // pred_fallthru
      _
    // Predicated region
    $region6: #{utility_function_forward.1} parent=1 // pred_check
      _
    $region7: #{utility_function_forward.1} parent=1 // pred_check_branch
      %19 = sbr.rel (0) target = $region9
    $region8: #{utility_function_forward.1} parent=1 // pred_region
      _
    $region9: #{utility_function_forward.1} parent=1 // pred_fallthru
      _
    // Predicated region
    $region10: #{utility_function_forward.1} parent=1 // pred_check
      _
    $region11: #{utility_function_forward.1} parent=1 // pred_check_branch
      %21 = sbr.rel (0) target = $region13
    $region12: #{utility_function_forward.1} parent=1 // pred_region
      %22 = dma.done [#allocation3], 16
    $region13: #{utility_function_forward.1} parent=1 // pred_fallthru
      _
    %23 = sfence
    %v24 = vld [vmem:[%s1] sm:$0x1]
    %s25 = sld [smem:[#allocation2]]
    %v26 = vstv %s25
    %v27 = vmul.f32 %v24, %v26
    %s28 = sld [smem:[#allocation2 + $0x2]]
    %v29 = vstv %s28
    %v30 = vadd.f32 %v27, %v29
    %v31 = vld [vmem:[%s1 + $0x1] sm:$0x1]
    %s32 = sld [smem:[#allocation2 + $0x1]]
    %v33 = vstv %s32
    %v34 = vmul.f32 %v31, %v33
    %s35 = sld [smem:[#allocation2 + $0x3]]
    %v36 = vstv %s35
    %v37 = vadd.f32 %v34, %v36
    %v38 = vmax.f32 %v30, %v37
    %s39 = sld [smem:[#allocation2 + $0x4]]
    %v40 = vstv %s39
    %v41 = vsub.f32 %v38, %v40
    %s42 = sld [smem:[#allocation2 + $0x5]]
    %v43 = vstv %s42
    %v44 = vmul.f32 %v41, %v43
    %45 = vst [vmem:[%s2] sm:$0x1] %v44
    // Predicated region
    $region14: #{utility_function_forward.1} parent=1 // pred_check
      _
    $region15: #{utility_function_forward.1} parent=1 // pred_check_branch
      %47 = sbr.rel (0) target = $region17
    $region16: #{utility_function_forward.1} parent=1 // pred_region
      _
    $region17: #{utility_function_forward.1} parent=1 // pred_fallthru
      _
    // Predicated region
    $region18: #{utility_function_forward.1} parent=1 // pred_check
      _
    $region19: #{utility_function_forward.1} parent=1 // pred_check_branch
      %49 = sbr.rel (0) target = $region21
    $region20: #{utility_function_forward.1} parent=1 // pred_region
      _
    $region21: #{utility_function_forward.1} parent=1 // pred_fallthru
      _
    %50 = vsyncpa [#allocation3], 1

</llo_original>
